<compile_context>
chip_gen: v7x
topology: tpu7x:2x2x1
jax: 0.10.0
libtpu: 0.0.40
codegen_flags: <defaults>
</compile_context>

<pallas_src>
import functools

import jax
import jax.numpy as jnp
from jax import lax
from jax.experimental import pallas as pl
from jax.experimental.pallas import tpu as pltpu


def _round_up(x, m):
    return ((x + m - 1) // m) * m


def tfidf_kernel(idx_ref, tf_ref, idf_ref, out_ref, *, vocab_chunk):
    """Fused idf-embedding gather + tf*idf multiply for a (TB, S_pad) tile of rows.

    idx_ref : (TB, S_pad) int32   token indices, sequence lane-dense
    tf_ref  : (TB, S_pad) f32     tf weights (output of the tf_weights submodule)
    idf_ref : (V_pad, 1)  f32     idf embedding table, vocab on sublanes
    out_ref : (TB, S_pad) f32     tf * idf[idx]
    """
    idx = idx_ref[...]                              # (TB, S_pad) int32
    tf_w = tf_ref[...]                              # (TB, S_pad) f32
    tb, s_pad = idx.shape
    v_pad = idf_ref.shape[0]
    n_chunks = v_pad // vocab_chunk

    idx3 = idx[:, None, :]                          # (TB, 1, S_pad) — S stays on lanes
    gathered = jnp.zeros((tb, s_pad), jnp.float32)

    # Static (unrolled) chunk loop — all slice offsets are compile-time constants.
    # TODO(synk): for very large vocab switch to a lax.fori_loop / vocab grid axis.
    for c in range(n_chunks):
        off = c * vocab_chunk
        # Vocab ids of this chunk, laid out on sublanes (lane/batch broadcast is implicit).
        ids = lax.broadcasted_iota(jnp.int32, (vocab_chunk, 1), 0) + off    # (Vc, 1)
        onehot = ids[None, :, :] == idx3                                     # (TB, Vc, S_pad)
        idf_chunk = idf_ref[pl.ds(off, vocab_chunk), :]                      # (Vc, 1)
        # Implicit broadcasting only (no jnp.broadcast_to): pick idf[v] where v == idx.
        sel = jnp.where(onehot, idf_chunk[None, :, :], jnp.float32(0.0))
        gathered = gathered + jnp.sum(sel, axis=1)                           # sublane reduce

    out_ref[...] = (tf_w * gathered).astype(out_ref.dtype)


def tfidf_weights_pallas(indices, tf_w, idf_weight, *,
                         rows_per_step=256, max_vocab_chunk=2048):
    """TfidfWeights.forward: tf_weights * idf_emb(indices).squeeze(2).

    indices    : (B, S) int               token indices (must lie in [0, V))
    tf_w       : (B, S) float             output of the tf_weights submodule
    idf_weight : (V, 1) or (V,) float     idf_emb.weight
    returns    : (B, S) float32
    """
    B, S = indices.shape
    idf = jnp.asarray(idf_weight, jnp.float32).reshape(-1)
    V = idf.shape[0]

    S_pad = _round_up(S, 128)                      # sequence on lanes → pad to 128

    # Rows per grid step: one step when the whole batch fits, else (TB multiple of 8) tiles.
    if B <= rows_per_step:
        TB, B_pad = B, B
    else:
        TB = _round_up(rows_per_step, 8)
        B_pad = _round_up(B, TB)
    grid_len = B_pad // TB

    # Vocab chunk: multiple of 8 (sublane granularity), capped so the (TB, Vc, S_pad)
    # one-hot intermediate stays <= ~4 MiB of f32 regardless of vocab size.
    cap = max(8, ((4 << 20) // (4 * TB * S_pad)) // 8 * 8)
    vocab_chunk = min(_round_up(V, 8), _round_up(max_vocab_chunk, 8), cap)
    V_pad = _round_up(V, vocab_chunk)

    idx_p = indices.astype(jnp.int32)
    tf_p = tf_w.astype(jnp.float32)
    if (B_pad, S_pad) != (B, S):
        # Pad tokens with -1 (matches no vocab id) and tf with 0; padding is sliced off.
        idx_p = jnp.pad(idx_p, ((0, B_pad - B), (0, S_pad - S)), constant_values=-1)
        tf_p = jnp.pad(tf_p, ((0, B_pad - B), (0, S_pad - S)))
    # Table with vocab on sublanes so chunk slices feed the sublane-reduce gather directly.
    # (Occupies ceil(V_pad/8)*4 KiB of VMEM; for very large vocab store lane-dense instead.)
    idf_col = jnp.pad(idf, (0, V_pad - V)).reshape(V_pad, 1)

    # Explicit VMEM budget (v7x: 64 MiB physical, 32 MiB scoped default).
    table_bytes = (_round_up(V_pad, 8) // 8) * (8 * 128 * 4)   # (V_pad, 1) tile footprint
    io_bytes = 2 * 3 * TB * S_pad * 4                          # double-buffered idx/tf/out
    tmp_bytes = 4 * TB * vocab_chunk * S_pad * 4               # one-hot / select temporaries
    vmem_limit = int(min(1.5 * (table_bytes + io_bytes + tmp_bytes) + (8 << 20), 48 << 20))

    out = pl.pallas_call(
        functools.partial(tfidf_kernel, vocab_chunk=vocab_chunk),
        grid=(grid_len,),
        in_specs=[
            pl.BlockSpec((TB, S_pad), lambda i: (i, 0)),
            pl.BlockSpec((TB, S_pad), lambda i: (i, 0)),
            # Whole idf table resident in VMEM: single copy, not double-buffered.
            pl.BlockSpec(memory_space=pltpu.MemorySpace.VMEM),
        ],
        out_specs=pl.BlockSpec((TB, S_pad), lambda i: (i, 0)),
        out_shape=jax.ShapeDtypeStruct((B_pad, S_pad), jnp.float32),
        compiler_params=pltpu.CompilerParams(
            # Shard batch tiles across TensorCores only when there are several of them;
            # a single tiny step gains nothing from megacore sharding (v7x).
            dimension_semantics=(("parallel",) if grid_len > 1 else ("arbitrary",)),
            vmem_limit_bytes=vmem_limit,
        ),
    )(idx_p, tf_p, idf_col)
    return out[:B, :S]


def term_frequency_weights(indices, w_es, instance):
    """Plain-JAX stand-in for the abstract tf_weights WeightingScheme submodule.

    Returns a simple term-frequency weight per token: count of the token within its own
    sentence divided by the sentence length.  (w_es / instance unused.)
    """
    del w_es, instance
    eq = (indices[:, :, None] == indices[:, None, :]).astype(jnp.float32)
    return eq.sum(-1) / indices.shape[1]


if __name__ == "__main__":
    batch, seq, e_size, vocab = 2, 8, 16, 512

    key = jax.random.PRNGKey(0)
    k_idx, k_emb, k_idf = jax.random.split(key, 3)

    indices = jax.random.randint(k_idx, (batch, seq), 0, vocab, dtype=jnp.int32)
    w_es = jax.random.normal(k_emb, (batch, seq, e_size), jnp.float32)
    # idf_emb: nn.Embedding(vocab, 1) weight table
    idf_weight = jax.random.uniform(k_idf, (vocab, 1), jnp.float32, 0.1, 5.0)

    instance = None
    tf_w = term_frequency_weights(indices, w_es, instance)

    tfidf = tfidf_weights_pallas(indices, tf_w, idf_weight)
    tfidf = jax.block_until_ready(tfidf)

    # Pure-JAX reference of TfidfWeights.forward
    ref = tf_w * idf_weight[:, 0][indices]

    assert tfidf.shape == (batch, seq)
    assert jnp.allclose(tfidf, ref, atol=1e-6, rtol=1e-6)
    print("KERNEL_OK")
</pallas_src>

<mosaic_0001>
module attributes {stable_mosaic.version = 11 : i64} {
  func.func @tfidf_kernel(%arg0: i32, %arg1: memref<2x128xi32, #tpu.memory_space<vmem>>, %arg2: memref<2x128xf32, #tpu.memory_space<vmem>>, %arg3: memref<512x1xf32, #tpu.memory_space<vmem>>, %arg4: memref<2x128xf32, #tpu.memory_space<vmem>>) attributes {dimension_semantics = [#tpu.dimension_semantics<arbitrary>], iteration_bounds = array<i64: 1>, scalar_prefetch = 0 : i64, scratch_operands = 0 : i64, tpu.core_type = #tpu.core_type<tc>, window_params = [{transform_indices = @transform_0, window_bounds = array<i64: 2, 128>}, {transform_indices = @transform_1, window_bounds = array<i64: 2, 128>}, {pipeline_mode = #tpu.pipeline_mode<synchronous>, transform_indices = @transform_2, window_bounds = array<i64: 512, 1>}, {transform_indices = @transform_3, window_bounds = array<i64: 2, 128>}]} {
    %c0 = arith.constant 0 : index
    %c0_0 = arith.constant 0 : index
    %0 = vector.load %arg1[%c0, %c0_0] : memref<2x128xi32, #tpu.memory_space<vmem>>, vector<2x128xi32>
    %c0_1 = arith.constant 0 : index
    %c0_2 = arith.constant 0 : index
    %1 = vector.load %arg2[%c0_1, %c0_2] : memref<2x128xf32, #tpu.memory_space<vmem>>, vector<2x128xf32>
    %2 = vector.shape_cast %0 : vector<2x128xi32> to vector<2x1x128xi32>
    %cst = arith.constant 0.000000e+00 : f32
    %3 = vector.broadcast %cst : f32 to vector<2x128xf32>
    %4 = tpu.iota {dimensions = array<i32: 0>} : vector<512x1xi32>
    %c0_i32 = arith.constant 0 : i32
    %5 = vector.broadcast %c0_i32 : i32 to vector<512x1xi32>
    %6 = arith.addi %4, %5 : vector<512x1xi32>
    %7 = vector.shape_cast %6 : vector<512x1xi32> to vector<1x512x1xi32>
    %8 = vector.broadcast %7 : vector<1x512x1xi32> to vector<2x512x128xi32>
    %9 = vector.broadcast %2 : vector<2x1x128xi32> to vector<2x512x128xi32>
    %10 = arith.cmpi eq, %8, %9 : vector<2x512x128xi32>
    %c0_3 = arith.constant 0 : index
    %c0_4 = arith.constant 0 : index
    %11 = vector.load %arg3[%c0_3, %c0_4] : memref<512x1xf32, #tpu.memory_space<vmem>>, vector<512x1xf32>
    %12 = vector.shape_cast %11 : vector<512x1xf32> to vector<1x512x1xf32>
    %cst_5 = arith.constant 0.000000e+00 : f32
    %13 = vector.shape_cast %12 : vector<1x512x1xf32> to vector<1x512x1xf32>
    %14 = vector.broadcast %13 : vector<1x512x1xf32> to vector<2x512x128xf32>
    %15 = vector.broadcast %cst_5 : f32 to vector<2x512x128xf32>
    %16 = arith.select %10, %14, %15 : vector<2x512x128xi1>, vector<2x512x128xf32>
    %cst_6 = arith.constant dense<0.000000e+00> : vector<2x128xf32>
    %17 = vector.multi_reduction <add>, %16, %cst_6 [1] : vector<2x512x128xf32> to vector<2x128xf32>
    %18 = arith.addf %3, %17 : vector<2x128xf32>
    %19 = arith.mulf %1, %18 : vector<2x128xf32>
    %c0_7 = arith.constant 0 : index
    %c0_8 = arith.constant 0 : index
    %20 = vector.load %arg4[%c0_7, %c0_8] : memref<2x128xf32, #tpu.memory_space<vmem>>, vector<2x128xf32>
    tpu.vector_store %arg4[%c0_7, %c0_8], %19 {strides = array<i32>} : memref<2x128xf32, #tpu.memory_space<vmem>>, vector<2x128xf32>,
    return
  }
  func.func @transform_0(%arg0: i32) -> (i32, i32) {
    %c0_i32 = arith.constant 0 : i32
    %c0_i32_0 = arith.constant 0 : i32
    return %arg0, %c0_i32 : i32, i32
  }
  func.func @transform_1(%arg0: i32) -> (i32, i32) {
    %c0_i32 = arith.constant 0 : i32
    %c0_i32_0 = arith.constant 0 : i32
    return %arg0, %c0_i32 : i32, i32
  }
  func.func @transform_2(%arg0: i32) -> (i32, i32) {
    %c0_i32 = arith.constant 0 : i32
    %c0_i32_0 = arith.constant 0 : i32
    %c0_i32_1 = arith.constant 0 : i32
    return %c0_i32, %c0_i32_0 : i32, i32
  }
  func.func @transform_3(%arg0: i32) -> (i32, i32) {
    %c0_i32 = arith.constant 0 : i32
    %c0_i32_0 = arith.constant 0 : i32
    return %arg0, %c0_i32 : i32, i32
  }
}

</mosaic_0001>

<llo_original>
// kernel: tpu_custom_call.1
$region0: #{tpu_custom_call.1}
  #allocation0 [shape = 'u32[]', space=smem, size = 0x4, offset = 0x4, fixed_abs, tag = 'smem constant byte address 0x4 - core index']
  #allocation1 [shape = 'u32[144,128]{1,0:T(1,128)}', space=vmem, size = 0x12000, scoped, tag = 'internal scratch']
  %s0 = inlined_call_operand.vmem [shape: s32[2,128], index: 0, kind: input, shape index: {}]
  %s1 = inlined_call_operand.vmem [shape: f32[2,128], index: 1, kind: input, shape index: {}]
  %s2 = inlined_call_operand.vmem [shape: f32[512,1], index: 2, kind: input, shape index: {}]
  %s3 = inlined_call_operand.hbm [shape: f32[2,128], index: 3, kind: output, shape index: {}]
  %s4 = sld [smem:[#allocation0]]
  $region22: #{tpu_custom_call.1} parent=0
    _
  %s6 = ssub.s32 1, %s4
  %s7 = scalar_select 0, %s6, %s4
  $region1: #{tpu_custom_call.1} parent=0
    #allocation2 [shape = 'u8[1024]{0}', space=vmem, size = 0x400, scoped, tag = 'output window, operand 0, single buffered']
    #allocation3 [shape = 's32[1]{0}', space=sflag, size = 0x4, scoped, tag = 'scoped memory for tpu_custom_call.1']
    %8 = vsyncpa [#allocation3], 0
    // Predicated region
    $region2: #{tpu_custom_call.1} parent=1 // pred_check
      _
    $region3: #{tpu_custom_call.1} parent=1 // pred_check_branch
      %10 = sbr.rel (0) target = $region5
    $region4: #{tpu_custom_call.1} parent=1 // pred_region
      _
    $region5: #{tpu_custom_call.1} parent=1 // pred_fallthru
      _
    // Predicated region
    $region6: #{tpu_custom_call.1} parent=1 // pred_check
      _
    $region7: #{tpu_custom_call.1} parent=1 // pred_check_branch
      %12 = sbr.rel (0) target = $region9
    $region8: #{tpu_custom_call.1} parent=1 // pred_region
      _
    $region9: #{tpu_custom_call.1} parent=1 // pred_fallthru
      _
    // Predicated region
    $region10: #{tpu_custom_call.1} parent=1 // pred_check
      _
    $region11: #{tpu_custom_call.1} parent=1 // pred_check_branch
      %14 = sbr.rel (0) target = $region13
    $region12: #{tpu_custom_call.1} parent=1 // pred_region
      _
    $region13: #{tpu_custom_call.1} parent=1 // pred_fallthru
      _
    %v15 = vld [vmem:[%s0] sm:$0x3]
    %v16 = vld [vmem:[%s1] sm:$0x3]
    %v18 = vunpack.c.l.s4 1966171168
    %v19 = vunpack.c.0.s8 %v18
    %v20 = vlaneseq
    %v21 = vshrl.u32 %v20, 7
    %v22 = vsub.s32 %v19, %v21
    %v23 = vrot.slane %v15, %v22
    %v24 = vcombine.high %v23, %v23
    %v26 = vunpack.c.l.s4 1966171168
    %v27 = vunpack.c.0.s8 %v26
    %v28 = vlaneseq
    %v29 = vshrl.u32 %v28, 7
    %v30 = vsub.s32 %v27, %v29
    %v31 = vrot.slane %v23, %v30
    %v33 = vunpack.c.l.s4 1966171168
    %v34 = vunpack.c.0.s8 %v33
    %v35 = vlaneseq
    %v36 = vshrl.u32 %v35, 7
    %v37 = vsub.s32 %v34, %v36
    %v38 = vrot.slane %v24, %v37
    %v39 = vlaneseq
    %v40 = vshrl.u32 %v39, 7
    %v41 = vadd.s32 %v40, 8
    %v42 = vadd.s32 %v40, 16
    %v43 = vadd.s32 %v40, 24
    %v44 = vadd.s32 %v40, 32
    %v45 = vadd.s32 %v40, 40
    %v46 = vadd.s32 %v40, 48
    %v47 = vadd.s32 %v40, 56
    %v48 = vadd.s32 %v40, 64
    %v49 = vadd.s32 %v40, 72
    %v50 = vadd.s32 %v40, 80
    %v51 = vadd.s32 %v40, 88
    %v52 = vadd.s32 %v40, 96
    %v53 = vadd.s32 %v40, 104
    %v54 = vadd.s32 %v40, 112
    %v55 = vadd.s32 %v40, 120
    %v56 = vadd.s32 %v40, 128
    %v57 = vadd.s32 %v40, 136
    %v58 = vadd.s32 %v40, 144
    %v59 = vadd.s32 %v40, 152
    %v60 = vadd.s32 %v40, 160
    %v61 = vadd.s32 %v40, 168
    %v62 = vadd.s32 %v40, 176
    %v63 = vadd.s32 %v40, 184
    %v64 = vadd.s32 %v40, 192
    %v65 = vadd.s32 %v40, 200
    %v66 = vadd.s32 %v40, 208
    %v67 = vadd.s32 %v40, 216
    %v68 = vadd.s32 %v40, 224
    %v69 = vadd.s32 %v40, 232
    %v70 = vadd.s32 %v40, 240
    %v71 = vadd.s32 %v40, 248
    %v72 = vadd.s32 %v40, 256
    %v73 = vadd.s32 %v40, 264
    %v74 = vadd.s32 %v40, 272
    %v75 = vadd.s32 %v40, 280
    %v76 = vadd.s32 %v40, 288
    %v77 = vadd.s32 %v40, 296
    %v78 = vadd.s32 %v40, 304
    %v79 = vadd.s32 %v40, 312
    %v80 = vadd.s32 %v40, 320
    %v81 = vadd.s32 %v40, 328
    %v82 = vadd.s32 %v40, 336
    %v83 = vadd.s32 %v40, 344
    %v84 = vadd.s32 %v40, 352
    %v85 = vadd.s32 %v40, 360
    %v86 = vadd.s32 %v40, 368
    %v87 = vadd.s32 %v40, 376
    %v88 = vadd.s32 %v40, 384
    %v89 = vadd.s32 %v40, 392
    %v90 = vadd.s32 %v40, 400
    %v91 = vadd.s32 %v40, 408
    %v92 = vadd.s32 %v40, 416
    %v93 = vadd.s32 %v40, 424
    %v94 = vadd.s32 %v40, 432
    %v95 = vadd.s32 %v40, 440
    %v96 = vadd.s32 %v40, 448
    %v97 = vadd.s32 %v40, 456
    %v98 = vadd.s32 %v40, 464
    %v99 = vadd.s32 %v40, 472
    %v100 = vadd.s32 %v40, 480
    %v101 = vadd.s32 %v40, 488
    %v102 = vadd.s32 %v40, 496
    %v103 = vadd.s32 %v40, 504
    %v104 = vlaneseq
    %v105 = vshrl.u32 %v104, 7
    %v106 = vsub.s32 0, %v105
    %v107 = vrot.slane %v31, %v106
    %v108 = vlaneseq
    %v109 = vshrl.u32 %v108, 7
    %v110 = vsub.s32 0, %v109
    %v111 = vrot.slane %v38, %v110
    %vm112 = vcmp.eq.s32.totalorder %v40, %v107
    %vm113 = vcmp.eq.s32.totalorder %v41, %v107
    %vm114 = vcmp.eq.s32.totalorder %v42, %v107
    %vm115 = vcmp.eq.s32.totalorder %v43, %v107
    %vm116 = vcmp.eq.s32.totalorder %v44, %v107
    %vm117 = vcmp.eq.s32.totalorder %v45, %v107
    %vm118 = vcmp.eq.s32.totalorder %v46, %v107
    %vm119 = vcmp.eq.s32.totalorder %v47, %v107
    %vm120 = vcmp.eq.s32.totalorder %v48, %v107
    %vm121 = vcmp.eq.s32.totalorder %v49, %v107
    %vm122 = vcmp.eq.s32.totalorder %v50, %v107
    %vm123 = vcmp.eq.s32.totalorder %v51, %v107
    %vm124 = vcmp.eq.s32.totalorder %v52, %v107
    %vm125 = vcmp.eq.s32.totalorder %v53, %v107
    %vm126 = vcmp.eq.s32.totalorder %v54, %v107
    %vm127 = vcmp.eq.s32.totalorder %v55, %v107
    %vm128 = vcmp.eq.s32.totalorder %v56, %v107
    %vm129 = vcmp.eq.s32.totalorder %v57, %v107
    %vm130 = vcmp.eq.s32.totalorder %v58, %v107
    %vm131 = vcmp.eq.s32.totalorder %v59, %v107
    %vm132 = vcmp.eq.s32.totalorder %v60, %v107
    %vm133 = vcmp.eq.s32.totalorder %v61, %v107
    %vm134 = vcmp.eq.s32.totalorder %v62, %v107
    %vm135 = vcmp.eq.s32.totalorder %v63, %v107
    %vm136 = vcmp.eq.s32.totalorder %v64, %v107
    %vm137 = vcmp.eq.s32.totalorder %v65, %v107
    %vm138 = vcmp.eq.s32.totalorder %v66, %v107
    %vm139 = vcmp.eq.s32.totalorder %v67, %v107
    %vm140 = vcmp.eq.s32.totalorder %v68, %v107
    %vm141 = vcmp.eq.s32.totalorder %v69, %v107
    %vm142 = vcmp.eq.s32.totalorder %v70, %v107
    %vm143 = vcmp.eq.s32.totalorder %v71, %v107
    %vm144 = vcmp.eq.s32.totalorder %v72, %v107
    %vm145 = vcmp.eq.s32.totalorder %v73, %v107
    %vm146 = vcmp.eq.s32.totalorder %v74, %v107
    %vm147 = vcmp.eq.s32.totalorder %v75, %v107
    %vm148 = vcmp.eq.s32.totalorder %v76, %v107
    %vm149 = vcmp.eq.s32.totalorder %v77, %v107
    %vm150 = vcmp.eq.s32.totalorder %v78, %v107
    %vm151 = vcmp.eq.s32.totalorder %v79, %v107
    %vm152 = vcmp.eq.s32.totalorder %v80, %v107
    %vm153 = vcmp.eq.s32.totalorder %v81, %v107
    %vm154 = vcmp.eq.s32.totalorder %v82, %v107
    %vm155 = vcmp.eq.s32.totalorder %v83, %v107
    %vm156 = vcmp.eq.s32.totalorder %v84, %v107
    %vm157 = vcmp.eq.s32.totalorder %v85, %v107
    %vm158 = vcmp.eq.s32.totalorder %v86, %v107
    %vm159 = vcmp.eq.s32.totalorder %v87, %v107
    %vm160 = vcmp.eq.s32.totalorder %v88, %v107
    %vm161 = vcmp.eq.s32.totalorder %v89, %v107
    %vm162 = vcmp.eq.s32.totalorder %v90, %v107
    %vm163 = vcmp.eq.s32.totalorder %v91, %v107
    %vm164 = vcmp.eq.s32.totalorder %v92, %v107
    %vm165 = vcmp.eq.s32.totalorder %v93, %v107
    %vm166 = vcmp.eq.s32.totalorder %v94, %v107
    %vm167 = vcmp.eq.s32.totalorder %v95, %v107
    %vm168 = vcmp.eq.s32.totalorder %v96, %v107
    %vm169 = vcmp.eq.s32.totalorder %v97, %v107
    %vm170 = vcmp.eq.s32.totalorder %v98, %v107
    %vm171 = vcmp.eq.s32.totalorder %v99, %v107
    %vm172 = vcmp.eq.s32.totalorder %v100, %v107
    %vm173 = vcmp.eq.s32.totalorder %v101, %v107
    %vm174 = vcmp.eq.s32.totalorder %v102, %v107
    %vm175 = vcmp.eq.s32.totalorder %v103, %v107
    %vm176 = vcmp.eq.s32.totalorder %v40, %v111
    %vm177 = vcmp.eq.s32.totalorder %v41, %v111
    %vm178 = vcmp.eq.s32.totalorder %v42, %v111
    %vm179 = vcmp.eq.s32.totalorder %v43, %v111
    %vm180 = vcmp.eq.s32.totalorder %v44, %v111
    %vm181 = vcmp.eq.s32.totalorder %v45, %v111
    %vm182 = vcmp.eq.s32.totalorder %v46, %v111
    %vm183 = vcmp.eq.s32.totalorder %v47, %v111
    %vm184 = vcmp.eq.s32.totalorder %v48, %v111
    %vm185 = vcmp.eq.s32.totalorder %v49, %v111
    %vm186 = vcmp.eq.s32.totalorder %v50, %v111
    %vm187 = vcmp.eq.s32.totalorder %v51, %v111
    %vm188 = vcmp.eq.s32.totalorder %v52, %v111
    %vm189 = vcmp.eq.s32.totalorder %v53, %v111
    %vm190 = vcmp.eq.s32.totalorder %v54, %v111
    %vm191 = vcmp.eq.s32.totalorder %v55, %v111
    %vm192 = vcmp.eq.s32.totalorder %v56, %v111
    %vm193 = vcmp.eq.s32.totalorder %v57, %v111
    %vm194 = vcmp.eq.s32.totalorder %v58, %v111
    %vm195 = vcmp.eq.s32.totalorder %v59, %v111
    %vm196 = vcmp.eq.s32.totalorder %v60, %v111
    %vm197 = vcmp.eq.s32.totalorder %v61, %v111
    %vm198 = vcmp.eq.s32.totalorder %v62, %v111
    %vm199 = vcmp.eq.s32.totalorder %v63, %v111
    %vm200 = vcmp.eq.s32.totalorder %v64, %v111
    %vm201 = vcmp.eq.s32.totalorder %v65, %v111
    %vm202 = vcmp.eq.s32.totalorder %v66, %v111
    %vm203 = vcmp.eq.s32.totalorder %v67, %v111
    %vm204 = vcmp.eq.s32.totalorder %v68, %v111
    %vm205 = vcmp.eq.s32.totalorder %v69, %v111
    %vm206 = vcmp.eq.s32.totalorder %v70, %v111
    %vm207 = vcmp.eq.s32.totalorder %v71, %v111
    %vm208 = vcmp.eq.s32.totalorder %v72, %v111
    %vm209 = vcmp.eq.s32.totalorder %v73, %v111
    %vm210 = vcmp.eq.s32.totalorder %v74, %v111
    %vm211 = vcmp.eq.s32.totalorder %v75, %v111
    %vm212 = vcmp.eq.s32.totalorder %v76, %v111
    %vm213 = vcmp.eq.s32.totalorder %v77, %v111
    %vm214 = vcmp.eq.s32.totalorder %v78, %v111
    %vm215 = vcmp.eq.s32.totalorder %v79, %v111
    %vm216 = vcmp.eq.s32.totalorder %v80, %v111
    %vm217 = vcmp.eq.s32.totalorder %v81, %v111
    %vm218 = vcmp.eq.s32.totalorder %v82, %v111
    %vm219 = vcmp.eq.s32.totalorder %v83, %v111
    %vm220 = vcmp.eq.s32.totalorder %v84, %v111
    %vm221 = vcmp.eq.s32.totalorder %v85, %v111
    %vm222 = vcmp.eq.s32.totalorder %v86, %v111
    %vm223 = vcmp.eq.s32.totalorder %v87, %v111
    %vm224 = vcmp.eq.s32.totalorder %v88, %v111
    %vm225 = vcmp.eq.s32.totalorder %v89, %v111
    %vm226 = vcmp.eq.s32.totalorder %v90, %v111
    %vm227 = vcmp.eq.s32.totalorder %v91, %v111
    %vm228 = vcmp.eq.s32.totalorder %v92, %v111
    %vm229 = vcmp.eq.s32.totalorder %v93, %v111
    %vm230 = vcmp.eq.s32.totalorder %v94, %v111
    %vm231 = vcmp.eq.s32.totalorder %v95, %v111
    %vm232 = vcmp.eq.s32.totalorder %v96, %v111
    %vm233 = vcmp.eq.s32.totalorder %v97, %v111
    %vm234 = vcmp.eq.s32.totalorder %v98, %v111
    %vm235 = vcmp.eq.s32.totalorder %v99, %v111
    %vm236 = vcmp.eq.s32.totalorder %v100, %v111
    %vm237 = vcmp.eq.s32.totalorder %v101, %v111
    %vm238 = vcmp.eq.s32.totalorder %v102, %v111
    %vm239 = vcmp.eq.s32.totalorder %v103, %v111
    %v240 = vld [vmem:[%s2] sm:$0xff]
    %v241 = vld [vmem:[%s2 + $0x8] sm:$0xff]
    %v242 = vld [vmem:[%s2 + $0x10] sm:$0xff]
    %v243 = vld [vmem:[%s2 + $0x18] sm:$0xff]
    %v244 = vld [vmem:[%s2 + $0x20] sm:$0xff]
    %v245 = vld [vmem:[%s2 + $0x28] sm:$0xff]
    %v246 = vld [vmem:[%s2 + $0x30] sm:$0xff]
    %v247 = vld [vmem:[%s2 + $0x38] sm:$0xff]
    %v248 = vld [vmem:[%s2 + $0x40] sm:$0xff]
    %v249 = vld [vmem:[%s2 + $0x48] sm:$0xff]
    %v250 = vld [vmem:[%s2 + $0x50] sm:$0xff]
    %v251 = vld [vmem:[%s2 + $0x58] sm:$0xff]
    %v252 = vld [vmem:[%s2 + $0x60] sm:$0xff]
    %v253 = vld [vmem:[%s2 + $0x68] sm:$0xff]
    %v254 = vld [vmem:[%s2 + $0x70] sm:$0xff]
    %v255 = vld [vmem:[%s2 + $0x78] sm:$0xff]
    %v256 = vld [vmem:[%s2 + $0x80] sm:$0xff]
    %v257 = vld [vmem:[%s2 + $0x88] sm:$0xff]
    %v258 = vld [vmem:[%s2 + $0x90] sm:$0xff]
    %v259 = vld [vmem:[%s2 + $0x98] sm:$0xff]
    %v260 = vld [vmem:[%s2 + $0xa0] sm:$0xff]
    %v261 = vld [vmem:[%s2 + $0xa8] sm:$0xff]
    %v262 = vld [vmem:[%s2 + $0xb0] sm:$0xff]
    %v263 = vld [vmem:[%s2 + $0xb8] sm:$0xff]
    %v264 = vld [vmem:[%s2 + $0xc0] sm:$0xff]
    %v265 = vld [vmem:[%s2 + $0xc8] sm:$0xff]
    %v266 = vld [vmem:[%s2 + $0xd0] sm:$0xff]
    %v267 = vld [vmem:[%s2 + $0xd8] sm:$0xff]
    %v268 = vld [vmem:[%s2 + $0xe0] sm:$0xff]
    %v269 = vld [vmem:[%s2 + $0xe8] sm:$0xff]
    %v270 = vld [vmem:[%s2 + $0xf0] sm:$0xff]
    %v271 = vld [vmem:[%s2 + $0xf8] sm:$0xff]
    %v272 = vld [vmem:[%s2 + $0x100] sm:$0xff]
    %v273 = vld [vmem:[%s2 + $0x108] sm:$0xff]
    %v274 = vld [vmem:[%s2 + $0x110] sm:$0xff]
    %v275 = vld [vmem:[%s2 + $0x118] sm:$0xff]
    %v276 = vld [vmem:[%s2 + $0x120] sm:$0xff]
    %v277 = vld [vmem:[%s2 + $0x128] sm:$0xff]
    %v278 = vld [vmem:[%s2 + $0x130] sm:$0xff]
    %v279 = vld [vmem:[%s2 + $0x138] sm:$0xff]
    %v280 = vld [vmem:[%s2 + $0x140] sm:$0xff]
    %v281 = vld [vmem:[%s2 + $0x148] sm:$0xff]
    %v282 = vld [vmem:[%s2 + $0x150] sm:$0xff]
    %v283 = vld [vmem:[%s2 + $0x158] sm:$0xff]
    %v284 = vld [vmem:[%s2 + $0x160] sm:$0xff]
    %v285 = vld [vmem:[%s2 + $0x168] sm:$0xff]
    %v286 = vld [vmem:[%s2 + $0x170] sm:$0xff]
    %v287 = vld [vmem:[%s2 + $0x178] sm:$0xff]
    %v288 = vld [vmem:[%s2 + $0x180] sm:$0xff]
    %v289 = vld [vmem:[%s2 + $0x188] sm:$0xff]
    %v290 = vld [vmem:[%s2 + $0x190] sm:$0xff]
    %v291 = vld [vmem:[%s2 + $0x198] sm:$0xff]
    %v292 = vld [vmem:[%s2 + $0x1a0] sm:$0xff]
    %v293 = vld [vmem:[%s2 + $0x1a8] sm:$0xff]
    %v294 = vld [vmem:[%s2 + $0x1b0] sm:$0xff]
    %v295 = vld [vmem:[%s2 + $0x1b8] sm:$0xff]
    %v296 = vld [vmem:[%s2 + $0x1c0] sm:$0xff]
    %v297 = vld [vmem:[%s2 + $0x1c8] sm:$0xff]
    %v298 = vld [vmem:[%s2 + $0x1d0] sm:$0xff]
    %v299 = vld [vmem:[%s2 + $0x1d8] sm:$0xff]
    %v300 = vld [vmem:[%s2 + $0x1e0] sm:$0xff]
    %v301 = vld [vmem:[%s2 + $0x1e8] sm:$0xff]
    %v302 = vld [vmem:[%s2 + $0x1f0] sm:$0xff]
    %v303 = vld [vmem:[%s2 + $0x1f8] sm:$0xff]
    %305 = vset.pattern.permute.xlu0 0
    %306 = vperm.xlu0 %305, %v240
    %v307 = vpop.permute.xlu0 %306
    %310 = vset.pattern.permute.xlu0 0
    %311 = vperm.xlu0 %310, %v241
    %v312 = vpop.permute.xlu0 %311
    %315 = vset.pattern.permute.xlu0 0
    %316 = vperm.xlu0 %315, %v242
    %v317 = vpop.permute.xlu0 %316
    %320 = vset.pattern.permute.xlu0 0
    %321 = vperm.xlu0 %320, %v243
    %v322 = vpop.permute.xlu0 %321
    %325 = vset.pattern.permute.xlu0 0
    %326 = vperm.xlu0 %325, %v244
    %v327 = vpop.permute.xlu0 %326
    %330 = vset.pattern.permute.xlu0 0
    %331 = vperm.xlu0 %330, %v245
    %v332 = vpop.permute.xlu0 %331
    %335 = vset.pattern.permute.xlu0 0
    %336 = vperm.xlu0 %335, %v246
    %v337 = vpop.permute.xlu0 %336
    %340 = vset.pattern.permute.xlu0 0
    %341 = vperm.xlu0 %340, %v247
    %v342 = vpop.permute.xlu0 %341
    %345 = vset.pattern.permute.xlu0 0
    %346 = vperm.xlu0 %345, %v248
    %v347 = vpop.permute.xlu0 %346
    %350 = vset.pattern.permute.xlu0 0
    %351 = vperm.xlu0 %350, %v249
    %v352 = vpop.permute.xlu0 %351
    %355 = vset.pattern.permute.xlu0 0
    %356 = vperm.xlu0 %355, %v250
    %v357 = vpop.permute.xlu0 %356
    %360 = vset.pattern.permute.xlu0 0
    %361 = vperm.xlu0 %360, %v251
    %v362 = vpop.permute.xlu0 %361
    %365 = vset.pattern.permute.xlu0 0
    %366 = vperm.xlu0 %365, %v252
    %v367 = vpop.permute.xlu0 %366
    %370 = vset.pattern.permute.xlu0 0
    %371 = vperm.xlu0 %370, %v253
    %v372 = vpop.permute.xlu0 %371
    %375 = vset.pattern.permute.xlu0 0
    %376 = vperm.xlu0 %375, %v254
    %v377 = vpop.permute.xlu0 %376
    %380 = vset.pattern.permute.xlu0 0
    %381 = vperm.xlu0 %380, %v255
    %v382 = vpop.permute.xlu0 %381
    %385 = vset.pattern.permute.xlu0 0
    %386 = vperm.xlu0 %385, %v256
    %v387 = vpop.permute.xlu0 %386
    %390 = vset.pattern.permute.xlu0 0
    %391 = vperm.xlu0 %390, %v257
    %v392 = vpop.permute.xlu0 %391
    %395 = vset.pattern.permute.xlu0 0
    %396 = vperm.xlu0 %395, %v258
    %v397 = vpop.permute.xlu0 %396
    %400 = vset.pattern.permute.xlu0 0
    %401 = vperm.xlu0 %400, %v259
    %v402 = vpop.permute.xlu0 %401
    %405 = vset.pattern.permute.xlu0 0
    %406 = vperm.xlu0 %405, %v260
    %v407 = vpop.permute.xlu0 %406
    %410 = vset.pattern.permute.xlu0 0
    %411 = vperm.xlu0 %410, %v261
    %v412 = vpop.permute.xlu0 %411
    %415 = vset.pattern.permute.xlu0 0
    %416 = vperm.xlu0 %415, %v262
    %v417 = vpop.permute.xlu0 %416
    %420 = vset.pattern.permute.xlu0 0
    %421 = vperm.xlu0 %420, %v263
    %v422 = vpop.permute.xlu0 %421
    %425 = vset.pattern.permute.xlu0 0
    %426 = vperm.xlu0 %425, %v264
    %v427 = vpop.permute.xlu0 %426
    %430 = vset.pattern.permute.xlu0 0
    %431 = vperm.xlu0 %430, %v265
    %v432 = vpop.permute.xlu0 %431
    %435 = vset.pattern.permute.xlu0 0
    %436 = vperm.xlu0 %435, %v266
    %v437 = vpop.permute.xlu0 %436
    %440 = vset.pattern.permute.xlu0 0
    %441 = vperm.xlu0 %440, %v267
    %v442 = vpop.permute.xlu0 %441
    %445 = vset.pattern.permute.xlu0 0
    %446 = vperm.xlu0 %445, %v268
    %v447 = vpop.permute.xlu0 %446
    %450 = vset.pattern.permute.xlu0 0
    %451 = vperm.xlu0 %450, %v269
    %v452 = vpop.permute.xlu0 %451
    %455 = vset.pattern.permute.xlu0 0
    %456 = vperm.xlu0 %455, %v270
    %v457 = vpop.permute.xlu0 %456
    %460 = vset.pattern.permute.xlu0 0
    %461 = vperm.xlu0 %460, %v271
    %v462 = vpop.permute.xlu0 %461
    %465 = vset.pattern.permute.xlu0 0
    %466 = vperm.xlu0 %465, %v272
    %v467 = vpop.permute.xlu0 %466
    %470 = vset.pattern.permute.xlu0 0
    %471 = vperm.xlu0 %470, %v273
    %v472 = vpop.permute.xlu0 %471
    %475 = vset.pattern.permute.xlu0 0
    %476 = vperm.xlu0 %475, %v274
    %v477 = vpop.permute.xlu0 %476
    %480 = vset.pattern.permute.xlu0 0
    %481 = vperm.xlu0 %480, %v275
    %v482 = vpop.permute.xlu0 %481
    %485 = vset.pattern.permute.xlu0 0
    %486 = vperm.xlu0 %485, %v276
    %v487 = vpop.permute.xlu0 %486
    %490 = vset.pattern.permute.xlu0 0
    %491 = vperm.xlu0 %490, %v277
    %v492 = vpop.permute.xlu0 %491
    %495 = vset.pattern.permute.xlu0 0
    %496 = vperm.xlu0 %495, %v278
    %v497 = vpop.permute.xlu0 %496
    %500 = vset.pattern.permute.xlu0 0
    %501 = vperm.xlu0 %500, %v279
    %v502 = vpop.permute.xlu0 %501
    %505 = vset.pattern.permute.xlu0 0
    %506 = vperm.xlu0 %505, %v280
    %v507 = vpop.permute.xlu0 %506
    %510 = vset.pattern.permute.xlu0 0
    %511 = vperm.xlu0 %510, %v281
    %v512 = vpop.permute.xlu0 %511
    %515 = vset.pattern.permute.xlu0 0
    %516 = vperm.xlu0 %515, %v282
    %v517 = vpop.permute.xlu0 %516
    %520 = vset.pattern.permute.xlu0 0
    %521 = vperm.xlu0 %520, %v283
    %v522 = vpop.permute.xlu0 %521
    %525 = vset.pattern.permute.xlu0 0
    %526 = vperm.xlu0 %525, %v284
    %v527 = vpop.permute.xlu0 %526
    %530 = vset.pattern.permute.xlu0 0
    %531 = vperm.xlu0 %530, %v285
    %v532 = vpop.permute.xlu0 %531
    %535 = vset.pattern.permute.xlu0 0
    %536 = vperm.xlu0 %535, %v286
    %v537 = vpop.permute.xlu0 %536
    %540 = vset.pattern.permute.xlu0 0
    %541 = vperm.xlu0 %540, %v287
    %v542 = vpop.permute.xlu0 %541
    %545 = vset.pattern.permute.xlu0 0
    %546 = vperm.xlu0 %545, %v288
    %v547 = vpop.permute.xlu0 %546
    %550 = vset.pattern.permute.xlu0 0
    %551 = vperm.xlu0 %550, %v289
    %v552 = vpop.permute.xlu0 %551
    %555 = vset.pattern.permute.xlu0 0
    %556 = vperm.xlu0 %555, %v290
    %v557 = vpop.permute.xlu0 %556
    %560 = vset.pattern.permute.xlu0 0
    %561 = vperm.xlu0 %560, %v291
    %v562 = vpop.permute.xlu0 %561
    %565 = vset.pattern.permute.xlu0 0
    %566 = vperm.xlu0 %565, %v292
    %v567 = vpop.permute.xlu0 %566
    %570 = vset.pattern.permute.xlu0 0
    %571 = vperm.xlu0 %570, %v293
    %v572 = vpop.permute.xlu0 %571
    %575 = vset.pattern.permute.xlu0 0
    %576 = vperm.xlu0 %575, %v294
    %v577 = vpop.permute.xlu0 %576
    %580 = vset.pattern.permute.xlu0 0
    %581 = vperm.xlu0 %580, %v295
    %v582 = vpop.permute.xlu0 %581
    %585 = vset.pattern.permute.xlu0 0
    %586 = vperm.xlu0 %585, %v296
    %v587 = vpop.permute.xlu0 %586
    %590 = vset.pattern.permute.xlu0 0
    %591 = vperm.xlu0 %590, %v297
    %v592 = vpop.permute.xlu0 %591
    %595 = vset.pattern.permute.xlu0 0
    %596 = vperm.xlu0 %595, %v298
    %v597 = vpop.permute.xlu0 %596
    %600 = vset.pattern.permute.xlu0 0
    %601 = vperm.xlu0 %600, %v299
    %v602 = vpop.permute.xlu0 %601
    %605 = vset.pattern.permute.xlu0 0
    %606 = vperm.xlu0 %605, %v300
    %v607 = vpop.permute.xlu0 %606
    %610 = vset.pattern.permute.xlu0 0
    %611 = vperm.xlu0 %610, %v301
    %v612 = vpop.permute.xlu0 %611
    %615 = vset.pattern.permute.xlu0 0
    %616 = vperm.xlu0 %615, %v302
    %v617 = vpop.permute.xlu0 %616
    %620 = vset.pattern.permute.xlu0 0
    %621 = vperm.xlu0 %620, %v303
    %v622 = vpop.permute.xlu0 %621
    %v624 = vsel %vm112, %v307, 0.0
    %v625 = vsel %vm113, %v312, 0.0
    %v626 = vsel %vm114, %v317, 0.0
    %v627 = vsel %vm115, %v322, 0.0
    %v628 = vsel %vm116, %v327, 0.0
    %v629 = vsel %vm117, %v332, 0.0
    %v630 = vsel %vm118, %v337, 0.0
    %v631 = vsel %vm119, %v342, 0.0
    %v632 = vsel %vm120, %v347, 0.0
    %v633 = vsel %vm121, %v352, 0.0
    %v634 = vsel %vm122, %v357, 0.0
    %v635 = vsel %vm123, %v362, 0.0
    %v636 = vsel %vm124, %v367, 0.0
    %v637 = vsel %vm125, %v372, 0.0
    %v638 = vsel %vm126, %v377, 0.0
    %v639 = vsel %vm127, %v382, 0.0
    %v640 = vsel %vm128, %v387, 0.0
    %v641 = vsel %vm129, %v392, 0.0
    %v642 = vsel %vm130, %v397, 0.0
    %v643 = vsel %vm131, %v402, 0.0
    %v644 = vsel %vm132, %v407, 0.0
    %v645 = vsel %vm133, %v412, 0.0
    %v646 = vsel %vm134, %v417, 0.0
    %v647 = vsel %vm135, %v422, 0.0
    %v648 = vsel %vm136, %v427, 0.0
    %v649 = vsel %vm137, %v432, 0.0
    %v650 = vsel %vm138, %v437, 0.0
    %v651 = vsel %vm139, %v442, 0.0
    %v652 = vsel %vm140, %v447, 0.0
    %v653 = vsel %vm141, %v452, 0.0
    %v654 = vsel %vm142, %v457, 0.0
    %v655 = vsel %vm143, %v462, 0.0
    %v656 = vsel %vm144, %v467, 0.0
    %v657 = vsel %vm145, %v472, 0.0
    %v658 = vsel %vm146, %v477, 0.0
    %v659 = vsel %vm147, %v482, 0.0
    %v660 = vsel %vm148, %v487, 0.0
    %v661 = vsel %vm149, %v492, 0.0
    %v662 = vsel %vm150, %v497, 0.0
    %v663 = vsel %vm151, %v502, 0.0
    %v664 = vsel %vm152, %v507, 0.0
    %v665 = vsel %vm153, %v512, 0.0
    %v666 = vsel %vm154, %v517, 0.0
    %v667 = vsel %vm155, %v522, 0.0
    %v668 = vsel %vm156, %v527, 0.0
    %v669 = vsel %vm157, %v532, 0.0
    %v670 = vsel %vm158, %v537, 0.0
    %v671 = vsel %vm159, %v542, 0.0
    %v672 = vsel %vm160, %v547, 0.0
    %v673 = vsel %vm161, %v552, 0.0
    %v674 = vsel %vm162, %v557, 0.0
    %v675 = vsel %vm163, %v562, 0.0
    %v676 = vsel %vm164, %v567, 0.0
    %v677 = vsel %vm165, %v572, 0.0
    %v678 = vsel %vm166, %v577, 0.0
    %v679 = vsel %vm167, %v582, 0.0
    %v680 = vsel %vm168, %v587, 0.0
    %v681 = vsel %vm169, %v592, 0.0
    %v682 = vsel %vm170, %v597, 0.0
    %v683 = vsel %vm171, %v602, 0.0
    %v684 = vsel %vm172, %v607, 0.0
    %v685 = vsel %vm173, %v612, 0.0
    %v686 = vsel %vm174, %v617, 0.0
    %v687 = vsel %vm175, %v622, 0.0
    %v688 = vsel %vm176, %v307, 0.0
    %v689 = vsel %vm177, %v312, 0.0
    %v690 = vsel %vm178, %v317, 0.0
    %v691 = vsel %vm179, %v322, 0.0
    %v692 = vsel %vm180, %v327, 0.0
    %v693 = vsel %vm181, %v332, 0.0
    %v694 = vsel %vm182, %v337, 0.0
    %v695 = vsel %vm183, %v342, 0.0
    %v696 = vsel %vm184, %v347, 0.0
    %v697 = vsel %vm185, %v352, 0.0
    %v698 = vsel %vm186, %v357, 0.0
    %v699 = vsel %vm187, %v362, 0.0
    %v700 = vsel %vm188, %v367, 0.0
    %v701 = vsel %vm189, %v372, 0.0
    %v702 = vsel %vm190, %v377, 0.0
    %v703 = vsel %vm191, %v382, 0.0
    %v704 = vsel %vm192, %v387, 0.0
    %v705 = vsel %vm193, %v392, 0.0
    %v706 = vsel %vm194, %v397, 0.0
    %v707 = vsel %vm195, %v402, 0.0
    %v708 = vsel %vm196, %v407, 0.0
    %v709 = vsel %vm197, %v412, 0.0
    %v710 = vsel %vm198, %v417, 0.0
    %v711 = vsel %vm199, %v422, 0.0
    %v712 = vsel %vm200, %v427, 0.0
    %v713 = vsel %vm201, %v432, 0.0
    %v714 = vsel %vm202, %v437, 0.0
    %v715 = vsel %vm203, %v442, 0.0
    %v716 = vsel %vm204, %v447, 0.0
    %v717 = vsel %vm205, %v452, 0.0
    %v718 = vsel %vm206, %v457, 0.0
    %v719 = vsel %vm207, %v462, 0.0
    %v720 = vsel %vm208, %v467, 0.0
    %v721 = vsel %vm209, %v472, 0.0
    %v722 = vsel %vm210, %v477, 0.0
    %v723 = vsel %vm211, %v482, 0.0
    %v724 = vsel %vm212, %v487, 0.0
    %v725 = vsel %vm213, %v492, 0.0
    %v726 = vsel %vm214, %v497, 0.0
    %v727 = vsel %vm215, %v502, 0.0
    %v728 = vsel %vm216, %v507, 0.0
    %v729 = vsel %vm217, %v512, 0.0
    %v730 = vsel %vm218, %v517, 0.0
    %v731 = vsel %vm219, %v522, 0.0
    %v732 = vsel %vm220, %v527, 0.0
    %v733 = vsel %vm221, %v532, 0.0
    %v734 = vsel %vm222, %v537, 0.0
    %v735 = vsel %vm223, %v542, 0.0
    %v736 = vsel %vm224, %v547, 0.0
    %v737 = vsel %vm225, %v552, 0.0
    %v738 = vsel %vm226, %v557, 0.0
    %v739 = vsel %vm227, %v562, 0.0
    %v740 = vsel %vm228, %v567, 0.0
    %v741 = vsel %vm229, %v572, 0.0
    %v742 = vsel %vm230, %v577, 0.0
    %v743 = vsel %vm231, %v582, 0.0
    %v744 = vsel %vm232, %v587, 0.0
    %v745 = vsel %vm233, %v592, 0.0
    %v746 = vsel %vm234, %v597, 0.0
    %v747 = vsel %vm235, %v602, 0.0
    %v748 = vsel %vm236, %v607, 0.0
    %v749 = vsel %vm237, %v612, 0.0
    %v750 = vsel %vm238, %v617, 0.0
    %v751 = vsel %vm239, %v622, 0.0
    %v752 = vadd.f32 %v624, %v625
    %v753 = vadd.f32 %v752, %v626
    %v754 = vadd.f32 %v753, %v627
    %v755 = vadd.f32 %v754, %v628
    %v756 = vadd.f32 %v755, %v629
    %v757 = vadd.f32 %v756, %v630
    %v758 = vadd.f32 %v757, %v631
    %v759 = vadd.f32 %v758, %v632
    %v760 = vadd.f32 %v759, %v633
    %v761 = vadd.f32 %v760, %v634
    %v762 = vadd.f32 %v761, %v635
    %v763 = vadd.f32 %v762, %v636
    %v764 = vadd.f32 %v763, %v637
    %v765 = vadd.f32 %v764, %v638
    %v766 = vadd.f32 %v765, %v639
    %v767 = vadd.f32 %v766, %v640
    %v768 = vadd.f32 %v767, %v641
    %v769 = vadd.f32 %v768, %v642
    %v770 = vadd.f32 %v769, %v643
    %v771 = vadd.f32 %v770, %v644
    %v772 = vadd.f32 %v771, %v645
    %v773 = vadd.f32 %v772, %v646
    %v774 = vadd.f32 %v773, %v647
    %v775 = vadd.f32 %v774, %v648
    %v776 = vadd.f32 %v775, %v649
    %v777 = vadd.f32 %v776, %v650
    %v778 = vadd.f32 %v777, %v651
    %v779 = vadd.f32 %v778, %v652
    %v780 = vadd.f32 %v779, %v653
    %v781 = vadd.f32 %v780, %v654
    %v782 = vadd.f32 %v781, %v655
    %v783 = vadd.f32 %v782, %v656
    %v784 = vadd.f32 %v783, %v657
    %v785 = vadd.f32 %v784, %v658
    %v786 = vadd.f32 %v785, %v659
    %v787 = vadd.f32 %v786, %v660
    %v788 = vadd.f32 %v787, %v661
    %v789 = vadd.f32 %v788, %v662
    %v790 = vadd.f32 %v789, %v663
    %v791 = vadd.f32 %v790, %v664
    %v792 = vadd.f32 %v791, %v665
    %v793 = vadd.f32 %v792, %v666
    %v794 = vadd.f32 %v793, %v667
    %v795 = vadd.f32 %v794, %v668
    %v796 = vadd.f32 %v795, %v669
    %v797 = vadd.f32 %v796, %v670
    %v798 = vadd.f32 %v797, %v671
    %v799 = vadd.f32 %v798, %v672
    %v800 = vadd.f32 %v799, %v673
    %v801 = vadd.f32 %v800, %v674
    %v802 = vadd.f32 %v801, %v675
    %v803 = vadd.f32 %v802, %v676
    %v804 = vadd.f32 %v803, %v677
    %v805 = vadd.f32 %v804, %v678
    %v806 = vadd.f32 %v805, %v679
    %v807 = vadd.f32 %v806, %v680
    %v808 = vadd.f32 %v807, %v681
    %v809 = vadd.f32 %v808, %v682
    %v810 = vadd.f32 %v809, %v683
    %v811 = vadd.f32 %v810, %v684
    %v812 = vadd.f32 %v811, %v685
    %v813 = vadd.f32 %v812, %v686
    %v814 = vadd.f32 %v813, %v687
    %v815 = vrot.slane %v814, 4
    %v816 = vadd.f32 %v814, %v815
    %v817 = vrot.slane %v816, 2
    %v818 = vadd.f32 %v816, %v817
    %v819 = vrot.slane %v818, 1
    %v820 = vadd.f32 %v818, %v819
    %v821 = vadd.f32 %v688, %v689
    %v822 = vadd.f32 %v821, %v690
    %v823 = vadd.f32 %v822, %v691
    %v824 = vadd.f32 %v823, %v692
    %v825 = vadd.f32 %v824, %v693
    %v826 = vadd.f32 %v825, %v694
    %v827 = vadd.f32 %v826, %v695
    %v828 = vadd.f32 %v827, %v696
    %v829 = vadd.f32 %v828, %v697
    %v830 = vadd.f32 %v829, %v698
    %v831 = vadd.f32 %v830, %v699
    %v832 = vadd.f32 %v831, %v700
    %v833 = vadd.f32 %v832, %v701
    %v834 = vadd.f32 %v833, %v702
    %v835 = vadd.f32 %v834, %v703
    %v836 = vadd.f32 %v835, %v704
    %v837 = vadd.f32 %v836, %v705
    %v838 = vadd.f32 %v837, %v706
    %v839 = vadd.f32 %v838, %v707
    %v840 = vadd.f32 %v839, %v708
    %v841 = vadd.f32 %v840, %v709
    %v842 = vadd.f32 %v841, %v710
    %v843 = vadd.f32 %v842, %v711
    %v844 = vadd.f32 %v843, %v712
    %v845 = vadd.f32 %v844, %v713
    %v846 = vadd.f32 %v845, %v714
    %v847 = vadd.f32 %v846, %v715
    %v848 = vadd.f32 %v847, %v716
    %v849 = vadd.f32 %v848, %v717
    %v850 = vadd.f32 %v849, %v718
    %v851 = vadd.f32 %v850, %v719
    %v852 = vadd.f32 %v851, %v720
    %v853 = vadd.f32 %v852, %v721
    %v854 = vadd.f32 %v853, %v722
    %v855 = vadd.f32 %v854, %v723
    %v856 = vadd.f32 %v855, %v724
    %v857 = vadd.f32 %v856, %v725
    %v858 = vadd.f32 %v857, %v726
    %v859 = vadd.f32 %v858, %v727
    %v860 = vadd.f32 %v859, %v728
    %v861 = vadd.f32 %v860, %v729
    %v862 = vadd.f32 %v861, %v730
    %v863 = vadd.f32 %v862, %v731
    %v864 = vadd.f32 %v863, %v732
    %v865 = vadd.f32 %v864, %v733
    %v866 = vadd.f32 %v865, %v734
    %v867 = vadd.f32 %v866, %v735
    %v868 = vadd.f32 %v867, %v736
    %v869 = vadd.f32 %v868, %v737
    %v870 = vadd.f32 %v869, %v738
    %v871 = vadd.f32 %v870, %v739
    %v872 = vadd.f32 %v871, %v740
    %v873 = vadd.f32 %v872, %v741
    %v874 = vadd.f32 %v873, %v742
    %v875 = vadd.f32 %v874, %v743
    %v876 = vadd.f32 %v875, %v744
    %v877 = vadd.f32 %v876, %v745
    %v878 = vadd.f32 %v877, %v746
    %v879 = vadd.f32 %v878, %v747
    %v880 = vadd.f32 %v879, %v748
    %v881 = vadd.f32 %v880, %v749
    %v882 = vadd.f32 %v881, %v750
    %v883 = vadd.f32 %v882, %v751
    %v884 = vrot.slane %v883, 4
    %v885 = vadd.f32 %v883, %v884
    %v886 = vrot.slane %v885, 2
    %v887 = vadd.f32 %v885, %v886
    %v888 = vrot.slane %v887, 1
    %v889 = vadd.f32 %v887, %v888
    %v890 = vadd.f32 %v820, 0.0
    %v891 = vadd.f32 %v889, 0.0
    %vm894 = vcmask 1041409
    %v895 = vsel %vm894, %v891, %v890
    %v897 = vmul.f32 %v16, %v895
    %898 = vst [vmem:[#allocation2] sm:$0x3] %v897
    // Predicated region
    $region14: #{tpu_custom_call.1} parent=1 // pred_check
      _
    $region15: #{tpu_custom_call.1} parent=1 // pred_check_branch
      %900 = sbr.rel (0) target = $region17
    $region16: #{tpu_custom_call.1} parent=1 // pred_region
      %s902 = ssub.s32 32, 32
      %903 = vsyncadd [#allocation3], %s902
      %s905 = sshll.u32 [#allocation2], 4
      %s906 = int_to_ptr.vmem [resolvable:$true] %s905
      %908 = dma.vmem_to_hbm [thread:$0]  %s906, 32, %s3, [#allocation3]
    $region17: #{tpu_custom_call.1} parent=1 // pred_fallthru
      _
    // Predicated region
    $region18: #{tpu_custom_call.1} parent=1 // pred_check
      _
    $region19: #{tpu_custom_call.1} parent=1 // pred_check_branch
      %910 = sbr.rel (0) target = $region21
    $region20: #{tpu_custom_call.1} parent=1 // pred_region
      %911 = dma.done [#allocation3], 32
    $region21: #{tpu_custom_call.1} parent=1 // pred_fallthru
      _
    %912 = vsyncpa [#allocation3], 1

</llo_original>
